<compile_context>
chip_gen: v6e
topology: v6e:2x2x1
jax: 0.10.0
libtpu: 0.0.40
codegen_flags: <defaults>
</compile_context>

<pallas_src>
import functools

import jax
import jax.numpy as jnp
from jax.experimental import pallas as pl
from jax.experimental.pallas import tpu as pltpu

_LANES = 128
_X_TILE_TARGET_BYTES = 2 * 1024 * 1024   # ~2 MiB of streamed x per grid step
_TB_MIN = 1024
_TB_MAX = 16384


def _round_up(a, m):
    return (a + m - 1) // m * m


def _cdiv(a, b):
    return -(-a // b)


def _vmem_budget_bytes():
    """Generation-aware usable-VMEM budget: 0.75 x physical, capped at 100 MiB.

    v7x (64 MiB physical) -> 48 MiB; v5e/v6e (128 MiB) -> 96 MiB. Falls back to the
    conservative 48 MiB budget if the hardware query is unavailable.
    """
    try:
        cap = int(pltpu.get_tpu_info().vmem_capacity_bytes)
    except Exception:
        cap = 64 * 1024 * 1024
    return int(min(cap * 3 // 4, 100 * 1024 * 1024))


def _vmem_estimate_bytes(tb, d_in, hidden, x_itemsize, w_itemsize, needs_cast):
    """Lane-padding-aware VMEM estimate for one pipelined grid step."""
    d_in_lanes = _round_up(d_in, _LANES)    # a (tb, d_in) block occupies 128 lanes per row
    est = 2 * tb * d_in_lanes * x_itemsize              # double-buffered streamed x tile
    if needs_cast:
        est += tb * d_in_lanes * w_itemsize              # in-kernel cast copy of x
    est += 2 * tb * 4                                    # double-buffered (1, 1, tb) f32 output
    est += 2 * hidden * d_in_lanes * w_itemsize          # fc1 weight (default 2 buffers)
    est += 2 * 2 * hidden * _LANES * 4                   # fc1 bias + fc2 weight (H, 1) columns
    est += 2 * hidden * tb * 4                           # f32 [H, tb] intermediate + temporary
    return est


def _mlp_kernel(x_ref, w1t_ref, b1_ref, w2_ref, b2_ref, o_ref, *, compute_dtype):
    # x tile: [TB, D_in]; the cast is a no-op when the caller already streams compute_dtype.
    x = x_ref[...].astype(compute_dtype)
    # fc1 computed transposed so the batch maps onto lanes:
    #   h_t[H, TB] = fc1_w[H, D_in] contracted with x[TB, D_in] over D_in (MXU, f32 acc).
    h_t = jax.lax.dot_general(
        w1t_ref[...], x,
        dimension_numbers=(((1,), (1,)), ((), ())),
        preferred_element_type=jnp.float32)
    h_t = jnp.maximum(h_t + b1_ref[...], 0.0)            # bias [H, 1] broadcasts over lanes
    # fc2 (single output feature): VPU multiply + sublane reduction instead of an N=1
    # MXU matmul. The result is already lane-dense: [1, TB].
    y = jnp.sum(h_t * w2_ref[...], axis=0, keepdims=True) + b2_ref[0, 0]
    o_ref[0] = y.astype(o_ref.dtype)


def regression_network_forward(x, fc1_w, fc1_b, fc2_w, fc2_b, *,
                               tile_batch=None, use_bf16=True):
    """Fused fc1 -> ReLU -> fc2 forward pass.

    x:     [B, D_in] float32 or bfloat16 (pass bf16 to halve the dominant HBM read)
    fc1_w: [H, D_in], fc1_b: [H]     (PyTorch nn.Linear layout)
    fc2_w: [1, H],    fc2_b: [1]
    returns: [B, 1] float32

    With use_bf16=True the MXU sees bf16 operands with f32 accumulation (~1e-2
    relative error); use_bf16=False is the near-exact escape hatch.
    """
    B, d_in = x.shape
    H = fc1_w.shape[0]
    assert fc1_w.shape == (H, d_in)
    assert fc1_b.shape == (H,)
    assert fc2_w.shape == (1, H)
    assert fc2_b.shape == (1,)

    compute_dtype = jnp.bfloat16 if use_bf16 else jnp.float32
    x_itemsize = jnp.dtype(x.dtype).itemsize
    w_itemsize = jnp.dtype(compute_dtype).itemsize
    needs_cast = jnp.dtype(x.dtype) != jnp.dtype(compute_dtype)

    # Operand layouts for the kernel.
    w1t = fc1_w.astype(compute_dtype)                    # [H, D_in]
    b1col = fc1_b.reshape(H, 1).astype(jnp.float32)      # [H, 1]
    w2col = fc2_w.reshape(H, 1).astype(jnp.float32)      # [H, 1]
    b2 = fc2_b.reshape(1, 1).astype(jnp.float32)         # [1, 1] scalar -> SMEM

    # --- Batch tile selection -------------------------------------------------
    # 1) Target ~2 MiB of streamed x bytes per grid step (the kernel is HBM /
    #    per-step-overhead bound), clamped to [1024, 16384] rows.
    if tile_batch is None:
        tb = _round_up(max(_X_TILE_TARGET_BYTES // max(d_in * x_itemsize, 1), 1), _LANES)
        tb = min(max(tb, _TB_MIN), _TB_MAX)
    else:
        tb = max(_LANES, _round_up(tile_batch, _LANES))
    tb = min(tb, _round_up(B, _LANES))                    # never exceed the padded batch

    # 2) Shrink until the lane-padding-aware VMEM estimate fits the per-generation budget.
    budget = _vmem_budget_bytes()
    while tb > _LANES and _vmem_estimate_bytes(
            tb, d_in, H, x_itemsize, w_itemsize, needs_cast) > budget:
        tb -= _LANES

    # 3) Even number of tiles so v7x's two TensorCores split the "parallel" axis
    #    evenly (harmless on single-core v5e/v6e).
    grid = _cdiv(B, tb)
    if grid > 1 and grid % 2 == 1:
        grid += 1
        tb = max(_LANES, _round_up(_cdiv(B, grid), _LANES))

    b_pad = grid * tb
    if b_pad != B:
        x = jnp.pad(x, ((0, b_pad - B), (0, 0)))

    out = pl.pallas_call(
        functools.partial(_mlp_kernel, compute_dtype=compute_dtype),
        out_shape=jax.ShapeDtypeStruct((grid, 1, tb), jnp.float32),
        grid=(grid,),
        in_specs=[
            pl.BlockSpec((tb, d_in), lambda i: (i, 0)),          # x: streamed over batch
            pl.BlockSpec((H, d_in), lambda i: (0, 0)),           # fc1 weight: VMEM-resident
            pl.BlockSpec((H, 1), lambda i: (0, 0)),              # fc1 bias (column)
            pl.BlockSpec((H, 1), lambda i: (0, 0)),              # fc2 weight (column)
            pl.BlockSpec(memory_space=pltpu.MemorySpace.SMEM),   # fc2 bias scalar
        ],
        out_specs=pl.BlockSpec((1, 1, tb), lambda i: (i, 0, 0)),
        compiler_params=pltpu.CompilerParams(
            dimension_semantics=("parallel",),
            vmem_limit_bytes=budget,
        ),
    )(x, w1t, b1col, w2col, b2)

    # Lane-dense slab back to [B, 1] (drop batch padding).
    return out.reshape(b_pad)[:B].reshape(B, 1)


def init_params(key, input_size, hidden=128):
    """Deterministic init mimicking PyTorch nn.Linear defaults (uniform +/- 1/sqrt(fan_in))."""
    k1, k2, k3, k4 = jax.random.split(key, 4)
    bound1 = 1.0 / jnp.sqrt(jnp.float32(input_size))
    bound2 = 1.0 / jnp.sqrt(jnp.float32(hidden))
    fc1_w = jax.random.uniform(k1, (hidden, input_size), jnp.float32, -bound1, bound1)
    fc1_b = jax.random.uniform(k2, (hidden,), jnp.float32, -bound1, bound1)
    fc2_w = jax.random.uniform(k3, (1, hidden), jnp.float32, -bound2, bound2)
    fc2_b = jax.random.uniform(k4, (1,), jnp.float32, -bound2, bound2)
    return fc1_w, fc1_b, fc2_w, fc2_b


def _ref_forward(x, fc1_w, fc1_b, fc2_w, fc2_b):
    hp = jax.lax.Precision.HIGHEST
    h = jnp.maximum(jnp.dot(x, fc1_w.T, precision=hp) + fc1_b[None, :], 0.0)
    return jnp.dot(h, fc2_w.T, precision=hp) + fc2_b[None, :]


if __name__ == "__main__":
    key = jax.random.PRNGKey(0)
    kx, kp = jax.random.split(key)

    batch = 300        # deliberately not a multiple of the tile to exercise padding
    input_size = 32    # plays the role of X_train.shape[1]
    hidden = 128

    x = jax.random.normal(kx, (batch, input_size), jnp.float32)
    fc1_w, fc1_b, fc2_w, fc2_b = init_params(kp, input_size, hidden)

    ref = _ref_forward(x, fc1_w, fc1_b, fc2_w, fc2_b)

    # Production path: auto-sized batch tile, bf16 compute.
    out = jax.block_until_ready(
        regression_network_forward(x, fc1_w, fc1_b, fc2_w, fc2_b))
    assert out.shape == (batch, 1)
    assert jnp.allclose(out, ref, atol=5e-2, rtol=5e-2)

    # Small forced tile -> multi-tile grid (exercises even-grid rounding), f32 compute.
    out_small = jax.block_until_ready(
        regression_network_forward(x, fc1_w, fc1_b, fc2_w, fc2_b,
                                   tile_batch=128, use_bf16=False))
    assert jnp.allclose(out_small, ref, atol=1e-2, rtol=1e-2)

    # bf16 x input: halves the dominant HBM read; the in-kernel cast becomes a no-op.
    x_bf16 = x.astype(jnp.bfloat16)
    ref_bf16 = _ref_forward(x_bf16.astype(jnp.float32), fc1_w, fc1_b, fc2_w, fc2_b)
    out_bf16 = jax.block_until_ready(
        regression_network_forward(x_bf16, fc1_w, fc1_b, fc2_w, fc2_b))
    assert jnp.allclose(out_bf16, ref_bf16, atol=5e-2, rtol=5e-2)

    print("KERNEL_OK")
</pallas_src>

<mosaic_0001>
module attributes {stable_mosaic.version = 11 : i64} {
  func.func @_mlp_kernel(%arg0: i32, %arg1: memref<384x32xf32, #tpu.memory_space<vmem>>, %arg2: memref<128x32xbf16, #tpu.memory_space<vmem>>, %arg3: memref<128x1xf32, #tpu.memory_space<vmem>>, %arg4: memref<128x1xf32, #tpu.memory_space<vmem>>, %arg5: memref<1x1xf32, #tpu.memory_space<smem>>, %arg6: memref<1x1x384xf32, #tpu.memory_space<vmem>>) attributes {dimension_semantics = [#tpu.dimension_semantics<parallel>], iteration_bounds = array<i64: 1>, scalar_prefetch = 0 : i64, scratch_operands = 0 : i64, tpu.core_type = #tpu.core_type<tc>, window_params = [{transform_indices = @transform_0, window_bounds = array<i64: 384, 32>}, {pipeline_mode = #tpu.pipeline_mode<synchronous>, transform_indices = @transform_1, window_bounds = array<i64: 128, 32>}, {pipeline_mode = #tpu.pipeline_mode<synchronous>, transform_indices = @transform_2, window_bounds = array<i64: 128, 1>}, {pipeline_mode = #tpu.pipeline_mode<synchronous>, transform_indices = @transform_3, window_bounds = array<i64: 128, 1>}, {transform_indices = @transform_4, window_bounds = array<i64: 1, 1>}, {transform_indices = @transform_5, window_bounds = array<i64: 1, 1, 384>}]} {
    %c0 = arith.constant 0 : index
    %c0_0 = arith.constant 0 : index
    %0 = vector.load %arg1[%c0, %c0_0] : memref<384x32xf32, #tpu.memory_space<vmem>>, vector<384x32xf32>
    %1 = arith.truncf %0 : vector<384x32xf32> to vector<384x32xbf16>
    %c0_1 = arith.constant 0 : index
    %c0_2 = arith.constant 0 : index
    %2 = vector.load %arg2[%c0_1, %c0_2] : memref<128x32xbf16, #tpu.memory_space<vmem>>, vector<128x32xbf16>
    %cst = arith.constant dense<0.000000e+00> : vector<128x384xf32>
    %3 = tpu.matmul %2, %1, %cst {dimension_numbers = #tpu.dot_dimension_numbers<[1], [1], [0], [0], [0, 0, 1, 0], [], []>} : vector<128x32xbf16>, vector<384x32xbf16>, vector<128x384xf32> -> vector<128x384xf32>
    %c0_3 = arith.constant 0 : index
    %c0_4 = arith.constant 0 : index
    %4 = vector.load %arg3[%c0_3, %c0_4] : memref<128x1xf32, #tpu.memory_space<vmem>>, vector<128x1xf32>
    %5 = vector.broadcast %4 : vector<128x1xf32> to vector<128x384xf32>
    %6 = arith.addf %3, %5 : vector<128x384xf32>
    %cst_5 = arith.constant 0.000000e+00 : f32
    %7 = vector.broadcast %cst_5 : f32 to vector<128x384xf32>
    %8 = arith.maximumf %6, %7 : vector<128x384xf32>
    %c0_6 = arith.constant 0 : index
    %c0_7 = arith.constant 0 : index
    %9 = vector.load %arg4[%c0_6, %c0_7] : memref<128x1xf32, #tpu.memory_space<vmem>>, vector<128x1xf32>
    %10 = vector.broadcast %9 : vector<128x1xf32> to vector<128x384xf32>
    %11 = arith.mulf %8, %10 : vector<128x384xf32>
    %cst_8 = arith.constant dense<0.000000e+00> : vector<384xf32>
    %12 = vector.multi_reduction <add>, %11, %cst_8 [0] : vector<128x384xf32> to vector<384xf32>
    %13 = vector.shape_cast %12 : vector<384xf32> to vector<1x384xf32>
    %c0_9 = arith.constant 0 : index
    %c0_10 = arith.constant 0 : index
    %14 = memref.load %arg5[%c0_9, %c0_10] : memref<1x1xf32, #tpu.memory_space<smem>>
    %15 = vector.broadcast %14 : f32 to vector<1x384xf32>
    %16 = arith.addf %13, %15 : vector<1x384xf32>
    %c0_11 = arith.constant 0 : index
    %c0_12 = arith.constant 0 : index
    %c0_13 = arith.constant 0 : index
    %17 = vector.load %arg6[%c0_11, %c0_12, %c0_13] : memref<1x1x384xf32, #tpu.memory_space<vmem>>, vector<1x1x384xf32>
    %18 = vector.shape_cast %17 : vector<1x1x384xf32> to vector<1x384xf32>
    %19 = vector.shape_cast %16 : vector<1x384xf32> to vector<1x1x384xf32>
    tpu.vector_store %arg6[%c0_11, %c0_12, %c0_13], %19 {strides = array<i32>} : memref<1x1x384xf32, #tpu.memory_space<vmem>>, vector<1x1x384xf32>,
    return
  }
  func.func @transform_0(%arg0: i32) -> (i32, i32) {
    %c0_i32 = arith.constant 0 : i32
    %c0_i32_0 = arith.constant 0 : i32
    return %arg0, %c0_i32 : i32, i32
  }
  func.func @transform_1(%arg0: i32) -> (i32, i32) {
    %c0_i32 = arith.constant 0 : i32
    %c0_i32_0 = arith.constant 0 : i32
    %c0_i32_1 = arith.constant 0 : i32
    return %c0_i32, %c0_i32_0 : i32, i32
  }
  func.func @transform_2(%arg0: i32) -> (i32, i32) {
    %c0_i32 = arith.constant 0 : i32
    %c0_i32_0 = arith.constant 0 : i32
    %c0_i32_1 = arith.constant 0 : i32
    return %c0_i32, %c0_i32_0 : i32, i32
  }
  func.func @transform_3(%arg0: i32) -> (i32, i32) {
    %c0_i32 = arith.constant 0 : i32
    %c0_i32_0 = arith.constant 0 : i32
    %c0_i32_1 = arith.constant 0 : i32
    return %c0_i32, %c0_i32_0 : i32, i32
  }
  func.func @transform_4(%arg0: i32) -> (i32, i32) {
    %c0_i32 = arith.constant 0 : i32
    %c0_i32_0 = arith.constant 0 : i32
    %c0_i32_1 = arith.constant 0 : i32
    return %c0_i32, %c0_i32_0 : i32, i32
  }
  func.func @transform_5(%arg0: i32) -> (i32, i32, i32) {
    %c0_i32 = arith.constant 0 : i32
    %c0_i32_0 = arith.constant 0 : i32
    %c0_i32_1 = arith.constant 0 : i32
    return %arg0, %c0_i32, %c0_i32_0 : i32, i32, i32
  }
}

</mosaic_0001>

<llo_original>
// kernel: tpu_custom_call.1
$region0: #{tpu_custom_call.1}
  #allocation0 [shape = 'u32[]', space=smem, size = 0x4, offset = 0x4, fixed_abs, tag = 'smem constant byte address 0x4 - core index']
  #allocation1 [shape = 'u32[144,128]{1,0:T(1,128)}', space=vmem, size = 0x12000, scoped, tag = 'internal scratch']
  #allocation2 [shape = 'f32[1,1]{1,0:T(1,128)S(6)}', space=smem, size = 0x200, scoped, tag = 'scoped memory for tpu_custom_call.1']
  %s0 = inlined_call_operand.vmem [shape: f32[384,32], index: 0, kind: input, shape index: {}]
  %s1 = inlined_call_operand.vmem [shape: bf16[128,32], index: 1, kind: input, shape index: {}]
  %s2 = inlined_call_operand.vmem [shape: f32[128,1], index: 2, kind: input, shape index: {}]
  %s3 = inlined_call_operand.vmem [shape: f32[128,1], index: 3, kind: input, shape index: {}]
  %s4 = inlined_call_operand.<no memory space> [shape: f32[1,1], index: 4, kind: input, shape index: {}]
  %s5 = inlined_call_operand.hbm [shape: f32[1,1,384], index: 5, kind: output, shape index: {}]
  %s6 = sld [smem:[#allocation0]]
  $region30: #{tpu_custom_call.1} parent=0
    _
  %s8 = ssub.s32 1, %s6
  %s9 = scalar_select 0, %s8, %s6
  %10 = sst [smem:[#allocation2]] %s4
  $region1: #{tpu_custom_call.1} parent=0
    #allocation3 [shape = 'u8[1536]{0}', space=vmem, size = 0x800, scoped, tag = 'output window, operand 0, single buffered']
    #allocation4 [shape = 's32[1]{0}', space=sflag, size = 0x4, scoped, tag = 'scoped memory for tpu_custom_call.1']
    %11 = vsyncpa [#allocation4], 0
    // Predicated region
    $region2: #{tpu_custom_call.1} parent=1 // pred_check
      _
    $region3: #{tpu_custom_call.1} parent=1 // pred_check_branch
      %13 = sbr.rel (0) target = $region5
    $region4: #{tpu_custom_call.1} parent=1 // pred_region
      _
    $region5: #{tpu_custom_call.1} parent=1 // pred_fallthru
      _
    // Predicated region
    $region6: #{tpu_custom_call.1} parent=1 // pred_check
      _
    $region7: #{tpu_custom_call.1} parent=1 // pred_check_branch
      %15 = sbr.rel (0) target = $region9
    $region8: #{tpu_custom_call.1} parent=1 // pred_region
      _
    $region9: #{tpu_custom_call.1} parent=1 // pred_fallthru
      _
    // Predicated region
    $region10: #{tpu_custom_call.1} parent=1 // pred_check
      _
    $region11: #{tpu_custom_call.1} parent=1 // pred_check_branch
      %17 = sbr.rel (0) target = $region13
    $region12: #{tpu_custom_call.1} parent=1 // pred_region
      _
    $region13: #{tpu_custom_call.1} parent=1 // pred_fallthru
      _
    // Predicated region
    $region14: #{tpu_custom_call.1} parent=1 // pred_check
      _
    $region15: #{tpu_custom_call.1} parent=1 // pred_check_branch
      %19 = sbr.rel (0) target = $region17
    $region16: #{tpu_custom_call.1} parent=1 // pred_region
      _
    $region17: #{tpu_custom_call.1} parent=1 // pred_fallthru
      _
    // Predicated region
    $region18: #{tpu_custom_call.1} parent=1 // pred_check
      _
    $region19: #{tpu_custom_call.1} parent=1 // pred_check_branch
      %21 = sbr.rel (0) target = $region21
    $region20: #{tpu_custom_call.1} parent=1 // pred_region
      _
    $region21: #{tpu_custom_call.1} parent=1 // pred_fallthru
      _
    %v23 = vld [vmem:[%s0] sm:$0xff]
    %v24 = vld [vmem:[%s0 + $0x8] sm:$0xff]
    %v25 = vld [vmem:[%s0 + $0x10] sm:$0xff]
    %v26 = vld [vmem:[%s0 + $0x18] sm:$0xff]
    %v27 = vld [vmem:[%s0 + $0x20] sm:$0xff]
    %v28 = vld [vmem:[%s0 + $0x28] sm:$0xff]
    %v29 = vld [vmem:[%s0 + $0x30] sm:$0xff]
    %v30 = vld [vmem:[%s0 + $0x38] sm:$0xff]
    %v31 = vld [vmem:[%s0 + $0x40] sm:$0xff]
    %v32 = vld [vmem:[%s0 + $0x48] sm:$0xff]
    %v33 = vld [vmem:[%s0 + $0x50] sm:$0xff]
    %v34 = vld [vmem:[%s0 + $0x58] sm:$0xff]
    %v35 = vld [vmem:[%s0 + $0x60] sm:$0xff]
    %v36 = vld [vmem:[%s0 + $0x68] sm:$0xff]
    %v37 = vld [vmem:[%s0 + $0x70] sm:$0xff]
    %v38 = vld [vmem:[%s0 + $0x78] sm:$0xff]
    %v39 = vld [vmem:[%s0 + $0x80] sm:$0xff]
    %v40 = vld [vmem:[%s0 + $0x88] sm:$0xff]
    %v41 = vld [vmem:[%s0 + $0x90] sm:$0xff]
    %v42 = vld [vmem:[%s0 + $0x98] sm:$0xff]
    %v43 = vld [vmem:[%s0 + $0xa0] sm:$0xff]
    %v44 = vld [vmem:[%s0 + $0xa8] sm:$0xff]
    %v45 = vld [vmem:[%s0 + $0xb0] sm:$0xff]
    %v46 = vld [vmem:[%s0 + $0xb8] sm:$0xff]
    %v47 = vld [vmem:[%s0 + $0xc0] sm:$0xff]
    %v48 = vld [vmem:[%s0 + $0xc8] sm:$0xff]
    %v49 = vld [vmem:[%s0 + $0xd0] sm:$0xff]
    %v50 = vld [vmem:[%s0 + $0xd8] sm:$0xff]
    %v51 = vld [vmem:[%s0 + $0xe0] sm:$0xff]
    %v52 = vld [vmem:[%s0 + $0xe8] sm:$0xff]
    %v53 = vld [vmem:[%s0 + $0xf0] sm:$0xff]
    %v54 = vld [vmem:[%s0 + $0xf8] sm:$0xff]
    %v55 = vld [vmem:[%s0 + $0x100] sm:$0xff]
    %v56 = vld [vmem:[%s0 + $0x108] sm:$0xff]
    %v57 = vld [vmem:[%s0 + $0x110] sm:$0xff]
    %v58 = vld [vmem:[%s0 + $0x118] sm:$0xff]
    %v59 = vld [vmem:[%s0 + $0x120] sm:$0xff]
    %v60 = vld [vmem:[%s0 + $0x128] sm:$0xff]
    %v61 = vld [vmem:[%s0 + $0x130] sm:$0xff]
    %v62 = vld [vmem:[%s0 + $0x138] sm:$0xff]
    %v63 = vld [vmem:[%s0 + $0x140] sm:$0xff]
    %v64 = vld [vmem:[%s0 + $0x148] sm:$0xff]
    %v65 = vld [vmem:[%s0 + $0x150] sm:$0xff]
    %v66 = vld [vmem:[%s0 + $0x158] sm:$0xff]
    %v67 = vld [vmem:[%s0 + $0x160] sm:$0xff]
    %v68 = vld [vmem:[%s0 + $0x168] sm:$0xff]
    %v69 = vld [vmem:[%s0 + $0x170] sm:$0xff]
    %v70 = vld [vmem:[%s0 + $0x178] sm:$0xff]
    %v71 = vpack.c.bf16 %v24, %v23
    %v72 = vpack.c.bf16 %v26, %v25
    %v73 = vpack.c.bf16 %v28, %v27
    %v74 = vpack.c.bf16 %v30, %v29
    %v75 = vpack.c.bf16 %v32, %v31
    %v76 = vpack.c.bf16 %v34, %v33
    %v77 = vpack.c.bf16 %v36, %v35
    %v78 = vpack.c.bf16 %v38, %v37
    %v79 = vpack.c.bf16 %v40, %v39
    %v80 = vpack.c.bf16 %v42, %v41
    %v81 = vpack.c.bf16 %v44, %v43
    %v82 = vpack.c.bf16 %v46, %v45
    %v83 = vpack.c.bf16 %v48, %v47
    %v84 = vpack.c.bf16 %v50, %v49
    %v85 = vpack.c.bf16 %v52, %v51
    %v86 = vpack.c.bf16 %v54, %v53
    %v87 = vpack.c.bf16 %v56, %v55
    %v88 = vpack.c.bf16 %v58, %v57
    %v89 = vpack.c.bf16 %v60, %v59
    %v90 = vpack.c.bf16 %v62, %v61
    %v91 = vpack.c.bf16 %v64, %v63
    %v92 = vpack.c.bf16 %v66, %v65
    %v93 = vpack.c.bf16 %v68, %v67
    %v94 = vpack.c.bf16 %v70, %v69
    %v95 = vld [vmem:[%s1] sm:$0xf]
    %v96 = vld [vmem:[%s1 + $0x4] sm:$0xf]
    %v97 = vld [vmem:[%s1 + $0x8] sm:$0xf]
    %v98 = vld [vmem:[%s1 + $0xc] sm:$0xf]
    %v99 = vld [vmem:[%s1 + $0x10] sm:$0xf]
    %v100 = vld [vmem:[%s1 + $0x14] sm:$0xf]
    %v101 = vld [vmem:[%s1 + $0x18] sm:$0xf]
    %v102 = vld [vmem:[%s1 + $0x1c] sm:$0xf]
    %v103 = vld [vmem:[%s1 + $0x20] sm:$0xf]
    %v104 = vld [vmem:[%s1 + $0x24] sm:$0xf]
    %v105 = vld [vmem:[%s1 + $0x28] sm:$0xf]
    %v106 = vld [vmem:[%s1 + $0x2c] sm:$0xf]
    %v107 = vld [vmem:[%s1 + $0x30] sm:$0xf]
    %v108 = vld [vmem:[%s1 + $0x34] sm:$0xf]
    %v109 = vld [vmem:[%s1 + $0x38] sm:$0xf]
    %v110 = vld [vmem:[%s1 + $0x3c] sm:$0xf]
    %v111 = vld [vmem:[%s2] sm:$0xff]
    %v112 = vld [vmem:[%s2 + $0x8] sm:$0xff]
    %v113 = vld [vmem:[%s2 + $0x10] sm:$0xff]
    %v114 = vld [vmem:[%s2 + $0x18] sm:$0xff]
    %v115 = vld [vmem:[%s2 + $0x20] sm:$0xff]
    %v116 = vld [vmem:[%s2 + $0x28] sm:$0xff]
    %v117 = vld [vmem:[%s2 + $0x30] sm:$0xff]
    %v118 = vld [vmem:[%s2 + $0x38] sm:$0xff]
    %v119 = vld [vmem:[%s2 + $0x40] sm:$0xff]
    %v120 = vld [vmem:[%s2 + $0x48] sm:$0xff]
    %v121 = vld [vmem:[%s2 + $0x50] sm:$0xff]
    %v122 = vld [vmem:[%s2 + $0x58] sm:$0xff]
    %v123 = vld [vmem:[%s2 + $0x60] sm:$0xff]
    %v124 = vld [vmem:[%s2 + $0x68] sm:$0xff]
    %v125 = vld [vmem:[%s2 + $0x70] sm:$0xff]
    %v126 = vld [vmem:[%s2 + $0x78] sm:$0xff]
    %128 = vset.pattern.permute.xlu0 0
    %129 = vperm.xlu0 %128, %v111
    %v130 = vpop.permute.xlu0 %129
    %133 = vset.pattern.permute.xlu0 0
    %134 = vperm.xlu0 %133, %v112
    %v135 = vpop.permute.xlu0 %134
    %138 = vset.pattern.permute.xlu0 0
    %139 = vperm.xlu0 %138, %v113
    %v140 = vpop.permute.xlu0 %139
    %143 = vset.pattern.permute.xlu0 0
    %144 = vperm.xlu0 %143, %v114
    %v145 = vpop.permute.xlu0 %144
    %148 = vset.pattern.permute.xlu0 0
    %149 = vperm.xlu0 %148, %v115
    %v150 = vpop.permute.xlu0 %149
    %153 = vset.pattern.permute.xlu0 0
    %154 = vperm.xlu0 %153, %v116
    %v155 = vpop.permute.xlu0 %154
    %158 = vset.pattern.permute.xlu0 0
    %159 = vperm.xlu0 %158, %v117
    %v160 = vpop.permute.xlu0 %159
    %163 = vset.pattern.permute.xlu0 0
    %164 = vperm.xlu0 %163, %v118
    %v165 = vpop.permute.xlu0 %164
    %168 = vset.pattern.permute.xlu0 0
    %169 = vperm.xlu0 %168, %v119
    %v170 = vpop.permute.xlu0 %169
    %173 = vset.pattern.permute.xlu0 0
    %174 = vperm.xlu0 %173, %v120
    %v175 = vpop.permute.xlu0 %174
    %178 = vset.pattern.permute.xlu0 0
    %179 = vperm.xlu0 %178, %v121
    %v180 = vpop.permute.xlu0 %179
    %183 = vset.pattern.permute.xlu0 0
    %184 = vperm.xlu0 %183, %v122
    %v185 = vpop.permute.xlu0 %184
    %188 = vset.pattern.permute.xlu0 0
    %189 = vperm.xlu0 %188, %v123
    %v190 = vpop.permute.xlu0 %189
    %193 = vset.pattern.permute.xlu0 0
    %194 = vperm.xlu0 %193, %v124
    %v195 = vpop.permute.xlu0 %194
    %198 = vset.pattern.permute.xlu0 0
    %199 = vperm.xlu0 %198, %v125
    %v200 = vpop.permute.xlu0 %199
    %203 = vset.pattern.permute.xlu0 0
    %204 = vperm.xlu0 %203, %v126
    %v205 = vpop.permute.xlu0 %204
    %v223 = vunpack.c.l.b16 %v95
    %v224 = vunpack.c.l.b16 %v96
    %v225 = vunpack.c.l.b16 %v97
    %v226 = vunpack.c.l.b16 %v98
    %v227 = vunpack.c.l.b16 %v99
    %v228 = vunpack.c.l.b16 %v100
    %v229 = vunpack.c.l.b16 %v101
    %v230 = vunpack.c.l.b16 %v102
    %v231 = vunpack.c.l.b16 %v103
    %v232 = vunpack.c.l.b16 %v104
    %v233 = vunpack.c.l.b16 %v105
    %v234 = vunpack.c.l.b16 %v106
    %v235 = vunpack.c.l.b16 %v107
    %v236 = vunpack.c.l.b16 %v108
    %v237 = vunpack.c.l.b16 %v109
    %v238 = vunpack.c.l.b16 %v110
    %v239 = vpack.c.b16 %v224, %v223
    %v240 = vpack.c.b16 %v226, %v225
    %v241 = vpack.c.b16 %v228, %v227
    %v242 = vpack.c.b16 %v230, %v229
    %v243 = vpack.c.b16 %v232, %v231
    %v244 = vpack.c.b16 %v234, %v233
    %v245 = vpack.c.b16 %v236, %v235
    %v246 = vpack.c.b16 %v238, %v237
    %vm247 = vcmask 261120
    %v249 = vsel %vm247, %v239, 0
    %v252 = vsel %vm247, %v240, 0
    %v255 = vsel %vm247, %v241, 0
    %v258 = vsel %vm247, %v242, 0
    %v261 = vsel %vm247, %v243, 0
    %v264 = vsel %vm247, %v244, 0
    %v267 = vsel %vm247, %v245, 0
    %v270 = vsel %vm247, %v246, 0
    %v273 = vsel %vm247, %v71, 0
    %v276 = vsel %vm247, %v72, 0
    %v279 = vsel %vm247, %v73, 0
    %v282 = vsel %vm247, %v74, 0
    %v285 = vsel %vm247, %v75, 0
    %v288 = vsel %vm247, %v76, 0
    %v291 = vsel %vm247, %v77, 0
    %v294 = vsel %vm247, %v78, 0
    %v297 = vsel %vm247, %v79, 0
    %v300 = vsel %vm247, %v80, 0
    %v303 = vsel %vm247, %v81, 0
    %v306 = vsel %vm247, %v82, 0
    %v309 = vsel %vm247, %v83, 0
    %v312 = vsel %vm247, %v84, 0
    %v315 = vsel %vm247, %v85, 0
    %v318 = vsel %vm247, %v86, 0
    %v321 = vsel %vm247, %v87, 0
    %v324 = vsel %vm247, %v88, 0
    %v327 = vsel %vm247, %v89, 0
    %v330 = vsel %vm247, %v90, 0
    %v333 = vsel %vm247, %v91, 0
    %v336 = vsel %vm247, %v92, 0
    %v339 = vsel %vm247, %v93, 0
    %v342 = vsel %vm247, %v94, 0
    %344 = vmatprep.subr.bf16.mxu0 0
    %345 = vmatpush1.bf16.xpose.msra.mxu0 %v294
    %346 = vmatprep.subr.bf16.mxu0 0
    %347 = vmatpush1.bf16.xpose.msra.mxu0 %v291
    %348 = vmatprep.subr.bf16.mxu0 0
    %349 = vmatpush1.bf16.xpose.msra.mxu0 %v288
    %350 = vmatprep.subr.bf16.mxu0 0
    %351 = vmatpush1.bf16.xpose.msra.mxu0 %v285
    %352 = vmatprep.subr.bf16.mxu0 0
    %353 = vmatpush1.bf16.xpose.msra.mxu0 %v282
    %354 = vmatprep.subr.bf16.mxu0 0
    %355 = vmatpush1.bf16.xpose.msra.mxu0 %v279
    %356 = vmatprep.subr.bf16.mxu0 0
    %357 = vmatpush1.bf16.xpose.msra.mxu0 %v276
    %358 = vmatprep.subr.bf16.mxu0 0
    %359 = vmatpush1.bf16.xpose.msra.mxu0 %v273
    %360 = vmatprep.subr.bf16.mxu0 0
    %361 = vmatpush2.bf16.xpose.msra.mxu0 %v318
    %362 = vmatprep.subr.bf16.mxu0 0
    %363 = vmatpush2.bf16.xpose.msra.mxu0 %v315
    %364 = vmatprep.subr.bf16.mxu0 0
    %365 = vmatpush2.bf16.xpose.msra.mxu0 %v312
    %366 = vmatprep.subr.bf16.mxu0 0
    %367 = vmatpush2.bf16.xpose.msra.mxu0 %v309
    %368 = vmatprep.subr.bf16.mxu0 0
    %369 = vmatpush2.bf16.xpose.msra.mxu0 %v306
    %370 = vmatprep.subr.bf16.mxu0 0
    %371 = vmatpush2.bf16.xpose.msra.mxu0 %v303
    %372 = vmatprep.subr.bf16.mxu0 0
    %373 = vmatpush2.bf16.xpose.msra.mxu0 %v300
    %374 = vmatprep.subr.bf16.mxu0 0
    %375 = vmatpush2.bf16.xpose.msra.mxu0 %v297
    %376 = vmatprep.mubr.bf16.mxu0 0
    %377 = vmatmul.mubr.bf16.gmra.mxu0 %v249
    %v378 = vpop.f32.mrf.mxu0
    %v379 = vadd.f32 %v130, %v378
    %v380 = vpop.f32.mrf.mxu0
    %v381 = vadd.f32 %v130, %v380
    %v382 = vpop.f32.mrf.mxu0
    %v383 = vadd.f32 %v135, %v382
    %v384 = vpop.f32.mrf.mxu0
    %v385 = vadd.f32 %v135, %v384
    %386 = vmatprep.mubr.bf16.mxu0 0
    %387 = vmatmul.mubr.bf16.gmra.mxu0 %v252
    %v388 = vpop.f32.mrf.mxu0
    %v389 = vadd.f32 %v140, %v388
    %v390 = vpop.f32.mrf.mxu0
    %v391 = vadd.f32 %v140, %v390
    %v392 = vpop.f32.mrf.mxu0
    %v393 = vadd.f32 %v145, %v392
    %v394 = vpop.f32.mrf.mxu0
    %v395 = vadd.f32 %v145, %v394
    %396 = vmatprep.mubr.bf16.mxu0 0
    %397 = vmatmul.mubr.bf16.gmra.mxu0 %v255
    %v398 = vpop.f32.mrf.mxu0
    %v399 = vadd.f32 %v150, %v398
    %v400 = vpop.f32.mrf.mxu0
    %v401 = vadd.f32 %v150, %v400
    %v402 = vpop.f32.mrf.mxu0
    %v403 = vadd.f32 %v155, %v402
    %v404 = vpop.f32.mrf.mxu0
    %v405 = vadd.f32 %v155, %v404
    %406 = vmatprep.mubr.bf16.mxu0 0
    %407 = vmatmul.mubr.bf16.gmra.mxu0 %v258
    %v408 = vpop.f32.mrf.mxu0
    %v409 = vadd.f32 %v160, %v408
    %v410 = vpop.f32.mrf.mxu0
    %v411 = vadd.f32 %v160, %v410
    %v412 = vpop.f32.mrf.mxu0
    %v413 = vadd.f32 %v165, %v412
    %v414 = vpop.f32.mrf.mxu0
    %v415 = vadd.f32 %v165, %v414
    %416 = vmatprep.mubr.bf16.mxu0 0
    %417 = vmatmul.mubr.bf16.gmra.mxu0 %v261
    %v418 = vpop.f32.mrf.mxu0
    %v419 = vadd.f32 %v170, %v418
    %v420 = vpop.f32.mrf.mxu0
    %v421 = vadd.f32 %v170, %v420
    %v422 = vpop.f32.mrf.mxu0
    %v423 = vadd.f32 %v175, %v422
    %v424 = vpop.f32.mrf.mxu0
    %v425 = vadd.f32 %v175, %v424
    %426 = vmatprep.mubr.bf16.mxu0 0
    %427 = vmatmul.mubr.bf16.gmra.mxu0 %v264
    %v428 = vpop.f32.mrf.mxu0
    %v429 = vadd.f32 %v180, %v428
    %v430 = vpop.f32.mrf.mxu0
    %v431 = vadd.f32 %v180, %v430
    %v432 = vpop.f32.mrf.mxu0
    %v433 = vadd.f32 %v185, %v432
    %v434 = vpop.f32.mrf.mxu0
    %v435 = vadd.f32 %v185, %v434
    %436 = vmatprep.mubr.bf16.mxu0 0
    %437 = vmatmul.mubr.bf16.gmra.mxu0 %v267
    %v438 = vpop.f32.mrf.mxu0
    %v439 = vadd.f32 %v190, %v438
    %v440 = vpop.f32.mrf.mxu0
    %v441 = vadd.f32 %v190, %v440
    %v442 = vpop.f32.mrf.mxu0
    %v443 = vadd.f32 %v195, %v442
    %v444 = vpop.f32.mrf.mxu0
    %v445 = vadd.f32 %v195, %v444
    %446 = vmatprep.mubr.bf16.mxu0 0
    %447 = vmatmul.mubr.bf16.gmra.mxu0 %v270
    %v448 = vpop.f32.mrf.mxu0
    %v449 = vadd.f32 %v200, %v448
    %v450 = vpop.f32.mrf.mxu0
    %v451 = vadd.f32 %v200, %v450
    %v452 = vpop.f32.mrf.mxu0
    %v453 = vadd.f32 %v205, %v452
    %v454 = vpop.f32.mrf.mxu0
    %v455 = vadd.f32 %v205, %v454
    %456 = vdwg.mxu0
    %457 = vmatprep.subr.bf16.mxu0 0
    %458 = vmatpush1.bf16.xpose.msra.mxu0 %v342
    %459 = vmatprep.subr.bf16.mxu0 0
    %460 = vmatpush1.bf16.xpose.msra.mxu0 %v339
    %461 = vmatprep.subr.bf16.mxu0 0
    %462 = vmatpush1.bf16.xpose.msra.mxu0 %v336
    %463 = vmatprep.subr.bf16.mxu0 0
    %464 = vmatpush1.bf16.xpose.msra.mxu0 %v333
    %465 = vmatprep.subr.bf16.mxu0 0
    %466 = vmatpush1.bf16.xpose.msra.mxu0 %v330
    %467 = vmatprep.subr.bf16.mxu0 0
    %468 = vmatpush1.bf16.xpose.msra.mxu0 %v327
    %469 = vmatprep.subr.bf16.mxu0 0
    %470 = vmatpush1.bf16.xpose.msra.mxu0 %v324
    %471 = vmatprep.subr.bf16.mxu0 0
    %472 = vmatpush1.bf16.xpose.msra.mxu0 %v321
    %473 = vmatprep.subr.bf16.mxu0 0
    %474 = vmatpush2.bf16.xpose.msra.mxu0 0
    %475 = vmatprep.subr.bf16.mxu0 0
    %476 = vmatpush2.bf16.xpose.msra.mxu0 0
    %477 = vmatprep.subr.bf16.mxu0 0
    %478 = vmatpush2.bf16.xpose.msra.mxu0 0
    %479 = vmatprep.subr.bf16.mxu0 0
    %480 = vmatpush2.bf16.xpose.msra.mxu0 0
    %481 = vmatprep.subr.bf16.mxu0 0
    %482 = vmatpush2.bf16.xpose.msra.mxu0 0
    %483 = vmatprep.subr.bf16.mxu0 0
    %484 = vmatpush2.bf16.xpose.msra.mxu0 0
    %485 = vmatprep.subr.bf16.mxu0 0
    %486 = vmatpush2.bf16.xpose.msra.mxu0 0
    %487 = vmatprep.subr.bf16.mxu0 0
    %488 = vmatpush2.bf16.xpose.msra.mxu0 0
    %489 = vmatprep.mubr.bf16.mxu0 0
    %490 = vmatmul.mubr.bf16.gmra.mxu0 %v249
    %v491 = vpop.f32.mrf.mxu0
    %v492 = vadd.f32 %v130, %v491
    %v493 = vpop.f32.mrf.mxu0
    %v494 = vpop.f32.mrf.mxu0
    %v495 = vadd.f32 %v135, %v494
    %v496 = vpop.f32.mrf.mxu0
    %497 = vmatprep.mubr.bf16.mxu0 0
    %498 = vmatmul.mubr.bf16.gmra.mxu0 %v252
    %v499 = vpop.f32.mrf.mxu0
    %v500 = vadd.f32 %v140, %v499
    %v501 = vpop.f32.mrf.mxu0
    %v502 = vpop.f32.mrf.mxu0
    %v503 = vadd.f32 %v145, %v502
    %v504 = vpop.f32.mrf.mxu0
    %505 = vmatprep.mubr.bf16.mxu0 0
    %506 = vmatmul.mubr.bf16.gmra.mxu0 %v255
    %v507 = vpop.f32.mrf.mxu0
    %v508 = vadd.f32 %v150, %v507
    %v509 = vpop.f32.mrf.mxu0
    %v510 = vpop.f32.mrf.mxu0
    %v511 = vadd.f32 %v155, %v510
    %v512 = vpop.f32.mrf.mxu0
    %513 = vmatprep.mubr.bf16.mxu0 0
    %514 = vmatmul.mubr.bf16.gmra.mxu0 %v258
    %v515 = vpop.f32.mrf.mxu0
    %v516 = vadd.f32 %v160, %v515
    %v517 = vpop.f32.mrf.mxu0
    %v518 = vpop.f32.mrf.mxu0
    %v519 = vadd.f32 %v165, %v518
    %v520 = vpop.f32.mrf.mxu0
    %521 = vmatprep.mubr.bf16.mxu0 0
    %522 = vmatmul.mubr.bf16.gmra.mxu0 %v261
    %v523 = vpop.f32.mrf.mxu0
    %v524 = vadd.f32 %v170, %v523
    %v525 = vpop.f32.mrf.mxu0
    %v526 = vpop.f32.mrf.mxu0
    %v527 = vadd.f32 %v175, %v526
    %v528 = vpop.f32.mrf.mxu0
    %529 = vmatprep.mubr.bf16.mxu0 0
    %530 = vmatmul.mubr.bf16.gmra.mxu0 %v264
    %v531 = vpop.f32.mrf.mxu0
    %v532 = vadd.f32 %v180, %v531
    %v533 = vpop.f32.mrf.mxu0
    %v534 = vpop.f32.mrf.mxu0
    %v535 = vadd.f32 %v185, %v534
    %v536 = vpop.f32.mrf.mxu0
    %537 = vmatprep.mubr.bf16.mxu0 0
    %538 = vmatmul.mubr.bf16.gmra.mxu0 %v267
    %v539 = vpop.f32.mrf.mxu0
    %v540 = vadd.f32 %v190, %v539
    %v541 = vpop.f32.mrf.mxu0
    %v542 = vpop.f32.mrf.mxu0
    %v543 = vadd.f32 %v195, %v542
    %v544 = vpop.f32.mrf.mxu0
    %545 = vmatprep.mubr.bf16.mxu0 0
    %546 = vmatmul.mubr.bf16.gmra.mxu0 %v270
    %v547 = vpop.f32.mrf.mxu0
    %v548 = vadd.f32 %v200, %v547
    %v549 = vpop.f32.mrf.mxu0
    %v550 = vpop.f32.mrf.mxu0
    %v551 = vadd.f32 %v205, %v550
    %v552 = vpop.f32.mrf.mxu0
    %553 = vdwg.mxu0
    %v554 = vmax.f32 %v379, 0.0
    %v555 = vmax.f32 %v381, 0.0
    %v556 = vmax.f32 %v492, 0.0
    %v557 = vmax.f32 %v383, 0.0
    %v558 = vmax.f32 %v385, 0.0
    %v559 = vmax.f32 %v495, 0.0
    %v560 = vmax.f32 %v389, 0.0
    %v561 = vmax.f32 %v391, 0.0
    %v562 = vmax.f32 %v500, 0.0
    %v563 = vmax.f32 %v393, 0.0
    %v564 = vmax.f32 %v395, 0.0
    %v565 = vmax.f32 %v503, 0.0
    %v566 = vmax.f32 %v399, 0.0
    %v567 = vmax.f32 %v401, 0.0
    %v568 = vmax.f32 %v508, 0.0
    %v569 = vmax.f32 %v403, 0.0
    %v570 = vmax.f32 %v405, 0.0
    %v571 = vmax.f32 %v511, 0.0
    %v572 = vmax.f32 %v409, 0.0
    %v573 = vmax.f32 %v411, 0.0
    %v574 = vmax.f32 %v516, 0.0
    %v575 = vmax.f32 %v413, 0.0
    %v576 = vmax.f32 %v415, 0.0
    %v577 = vmax.f32 %v519, 0.0
    %v578 = vmax.f32 %v419, 0.0
    %v579 = vmax.f32 %v421, 0.0
    %v580 = vmax.f32 %v524, 0.0
    %v581 = vmax.f32 %v423, 0.0
    %v582 = vmax.f32 %v425, 0.0
    %v583 = vmax.f32 %v527, 0.0
    %v584 = vmax.f32 %v429, 0.0
    %v585 = vmax.f32 %v431, 0.0
    %v586 = vmax.f32 %v532, 0.0
    %v587 = vmax.f32 %v433, 0.0
    %v588 = vmax.f32 %v435, 0.0
    %v589 = vmax.f32 %v535, 0.0
    %v590 = vmax.f32 %v439, 0.0
    %v591 = vmax.f32 %v441, 0.0
    %v592 = vmax.f32 %v540, 0.0
    %v593 = vmax.f32 %v443, 0.0
    %v594 = vmax.f32 %v445, 0.0
    %v595 = vmax.f32 %v543, 0.0
    %v596 = vmax.f32 %v449, 0.0
    %v597 = vmax.f32 %v451, 0.0
    %v598 = vmax.f32 %v548, 0.0
    %v599 = vmax.f32 %v453, 0.0
    %v600 = vmax.f32 %v455, 0.0
    %v601 = vmax.f32 %v551, 0.0
    %v602 = vld [vmem:[%s3] sm:$0xff]
    %v603 = vld [vmem:[%s3 + $0x8] sm:$0xff]
    %v604 = vld [vmem:[%s3 + $0x10] sm:$0xff]
    %v605 = vld [vmem:[%s3 + $0x18] sm:$0xff]
    %v606 = vld [vmem:[%s3 + $0x20] sm:$0xff]
    %v607 = vld [vmem:[%s3 + $0x28] sm:$0xff]
    %v608 = vld [vmem:[%s3 + $0x30] sm:$0xff]
    %v609 = vld [vmem:[%s3 + $0x38] sm:$0xff]
    %v610 = vld [vmem:[%s3 + $0x40] sm:$0xff]
    %v611 = vld [vmem:[%s3 + $0x48] sm:$0xff]
    %v612 = vld [vmem:[%s3 + $0x50] sm:$0xff]
    %v613 = vld [vmem:[%s3 + $0x58] sm:$0xff]
    %v614 = vld [vmem:[%s3 + $0x60] sm:$0xff]
    %v615 = vld [vmem:[%s3 + $0x68] sm:$0xff]
    %v616 = vld [vmem:[%s3 + $0x70] sm:$0xff]
    %v617 = vld [vmem:[%s3 + $0x78] sm:$0xff]
    %619 = vset.pattern.permute.xlu0 0
    %620 = vperm.xlu0 %619, %v602
    %v621 = vpop.permute.xlu0 %620
    %624 = vset.pattern.permute.xlu0 0
    %625 = vperm.xlu0 %624, %v603
    %v626 = vpop.permute.xlu0 %625
    %629 = vset.pattern.permute.xlu0 0
    %630 = vperm.xlu0 %629, %v604
    %v631 = vpop.permute.xlu0 %630
    %634 = vset.pattern.permute.xlu0 0
    %635 = vperm.xlu0 %634, %v605
    %v636 = vpop.permute.xlu0 %635
    %639 = vset.pattern.permute.xlu0 0
    %640 = vperm.xlu0 %639, %v606
    %v641 = vpop.permute.xlu0 %640
    %644 = vset.pattern.permute.xlu0 0
    %645 = vperm.xlu0 %644, %v607
    %v646 = vpop.permute.xlu0 %645
    %649 = vset.pattern.permute.xlu0 0
    %650 = vperm.xlu0 %649, %v608
    %v651 = vpop.permute.xlu0 %650
    %654 = vset.pattern.permute.xlu0 0
    %655 = vperm.xlu0 %654, %v609
    %v656 = vpop.permute.xlu0 %655
    %659 = vset.pattern.permute.xlu0 0
    %660 = vperm.xlu0 %659, %v610
    %v661 = vpop.permute.xlu0 %660
    %664 = vset.pattern.permute.xlu0 0
    %665 = vperm.xlu0 %664, %v611
    %v666 = vpop.permute.xlu0 %665
    %669 = vset.pattern.permute.xlu0 0
    %670 = vperm.xlu0 %669, %v612
    %v671 = vpop.permute.xlu0 %670
    %674 = vset.pattern.permute.xlu0 0
    %675 = vperm.xlu0 %674, %v613
    %v676 = vpop.permute.xlu0 %675
    %679 = vset.pattern.permute.xlu0 0
    %680 = vperm.xlu0 %679, %v614
    %v681 = vpop.permute.xlu0 %680
    %684 = vset.pattern.permute.xlu0 0
    %685 = vperm.xlu0 %684, %v615
    %v686 = vpop.permute.xlu0 %685
    %689 = vset.pattern.permute.xlu0 0
    %690 = vperm.xlu0 %689, %v616
    %v691 = vpop.permute.xlu0 %690
    %694 = vset.pattern.permute.xlu0 0
    %695 = vperm.xlu0 %694, %v617
    %v696 = vpop.permute.xlu0 %695
    %v698 = vmul.f32 %v554, %v621
    %v699 = vmul.f32 %v555, %v621
    %v700 = vmul.f32 %v556, %v621
    %v701 = vmul.f32 %v557, %v626
    %v702 = vmul.f32 %v558, %v626
    %v703 = vmul.f32 %v559, %v626
    %v704 = vmul.f32 %v560, %v631
    %v705 = vmul.f32 %v561, %v631
    %v706 = vmul.f32 %v562, %v631
    %v707 = vmul.f32 %v563, %v636
    %v708 = vmul.f32 %v564, %v636
    %v709 = vmul.f32 %v565, %v636
    %v710 = vmul.f32 %v566, %v641
    %v711 = vmul.f32 %v567, %v641
    %v712 = vmul.f32 %v568, %v641
    %v713 = vmul.f32 %v569, %v646
    %v714 = vmul.f32 %v570, %v646
    %v715 = vmul.f32 %v571, %v646
    %v716 = vmul.f32 %v572, %v651
    %v717 = vmul.f32 %v573, %v651
    %v718 = vmul.f32 %v574, %v651
    %v719 = vmul.f32 %v575, %v656
    %v720 = vmul.f32 %v576, %v656
    %v721 = vmul.f32 %v577, %v656
    %v722 = vmul.f32 %v578, %v661
    %v723 = vmul.f32 %v579, %v661
    %v724 = vmul.f32 %v580, %v661
    %v725 = vmul.f32 %v581, %v666
    %v726 = vmul.f32 %v582, %v666
    %v727 = vmul.f32 %v583, %v666
    %v728 = vmul.f32 %v584, %v671
    %v729 = vmul.f32 %v585, %v671
    %v730 = vmul.f32 %v586, %v671
    %v731 = vmul.f32 %v587, %v676
    %v732 = vmul.f32 %v588, %v676
    %v733 = vmul.f32 %v589, %v676
    %v734 = vmul.f32 %v590, %v681
    %v735 = vmul.f32 %v591, %v681
    %v736 = vmul.f32 %v592, %v681
    %v737 = vmul.f32 %v593, %v686
    %v738 = vmul.f32 %v594, %v686
    %v739 = vmul.f32 %v595, %v686
    %v740 = vmul.f32 %v596, %v691
    %v741 = vmul.f32 %v597, %v691
    %v742 = vmul.f32 %v598, %v691
    %v743 = vmul.f32 %v599, %v696
    %v744 = vmul.f32 %v600, %v696
    %v745 = vmul.f32 %v601, %v696
    %v746 = vadd.f32 %v698, %v701
    %v747 = vadd.f32 %v746, %v704
    %v748 = vadd.f32 %v747, %v707
    %v749 = vadd.f32 %v748, %v710
    %v750 = vadd.f32 %v749, %v713
    %v751 = vadd.f32 %v750, %v716
    %v752 = vadd.f32 %v751, %v719
    %v753 = vadd.f32 %v752, %v722
    %v754 = vadd.f32 %v753, %v725
    %v755 = vadd.f32 %v754, %v728
    %v756 = vadd.f32 %v755, %v731
    %v757 = vadd.f32 %v756, %v734
    %v758 = vadd.f32 %v757, %v737
    %v759 = vadd.f32 %v758, %v740
    %v760 = vadd.f32 %v759, %v743
    %v761 = vrot.slane %v760, 4
    %v762 = vadd.f32 %v760, %v761
    %v763 = vrot.slane %v762, 2
    %v764 = vadd.f32 %v762, %v763
    %v765 = vrot.slane %v764, 1
    %v766 = vadd.f32 %v764, %v765
    %v767 = vadd.f32 %v699, %v702
    %v768 = vadd.f32 %v767, %v705
    %v769 = vadd.f32 %v768, %v708
    %v770 = vadd.f32 %v769, %v711
    %v771 = vadd.f32 %v770, %v714
    %v772 = vadd.f32 %v771, %v717
    %v773 = vadd.f32 %v772, %v720
    %v774 = vadd.f32 %v773, %v723
    %v775 = vadd.f32 %v774, %v726
    %v776 = vadd.f32 %v775, %v729
    %v777 = vadd.f32 %v776, %v732
    %v778 = vadd.f32 %v777, %v735
    %v779 = vadd.f32 %v778, %v738
    %v780 = vadd.f32 %v779, %v741
    %v781 = vadd.f32 %v780, %v744
    %v782 = vrot.slane %v781, 4
    %v783 = vadd.f32 %v781, %v782
    %v784 = vrot.slane %v783, 2
    %v785 = vadd.f32 %v783, %v784
    %v786 = vrot.slane %v785, 1
    %v787 = vadd.f32 %v785, %v786
    %v788 = vadd.f32 %v700, %v703
    %v789 = vadd.f32 %v788, %v706
    %v790 = vadd.f32 %v789, %v709
    %v791 = vadd.f32 %v790, %v712
    %v792 = vadd.f32 %v791, %v715
    %v793 = vadd.f32 %v792, %v718
    %v794 = vadd.f32 %v793, %v721
    %v795 = vadd.f32 %v794, %v724
    %v796 = vadd.f32 %v795, %v727
    %v797 = vadd.f32 %v796, %v730
    %v798 = vadd.f32 %v797, %v733
    %v799 = vadd.f32 %v798, %v736
    %v800 = vadd.f32 %v799, %v739
    %v801 = vadd.f32 %v800, %v742
    %v802 = vadd.f32 %v801, %v745
    %v803 = vrot.slane %v802, 4
    %v804 = vadd.f32 %v802, %v803
    %v805 = vrot.slane %v804, 2
    %v806 = vadd.f32 %v804, %v805
    %v807 = vrot.slane %v806, 1
    %v808 = vadd.f32 %v806, %v807
    %s809 = sld [smem:[#allocation2]]
    %v810 = vstv %s809
    %v811 = vadd.f32 %v766, %v810
    %v812 = vadd.f32 %v787, %v810
    %v813 = vadd.f32 %v808, %v810
    %v817 = vcombine.low %v811, %v812
    %v819 = vunpack.c.l.s4 1966171168
    %v820 = vunpack.c.0.s8 %v819
    %v821 = vlaneseq
    %v822 = vshrl.u32 %v821, 7
    %v823 = vsub.s32 %v820, %v822
    %v824 = vrot.slane %v817, %v823
    %v826 = vunpack.c.l.s4 1966171168
    %v827 = vunpack.c.0.s8 %v826
    %v828 = vlaneseq
    %v829 = vshrl.u32 %v828, 7
    %v830 = vsub.s32 %v827, %v829
    %v831 = vrot.slane %v813, %v830
    %v832 = vcombine.low %v824, %v831
    %v834 = vunpack.c.l.s4 1966171168
    %v835 = vunpack.c.0.s8 %v834
    %v836 = vlaneseq
    %v837 = vshrl.u32 %v836, 7
    %v838 = vsub.s32 %v835, %v837
    %v839 = vrot.slane %v832, %v838
    %v841 = vlaneseq
    %vm842 = vcmp.ge.s32.totalorder %v841, 0
    %vm843 = vcmp.lt.s32.totalorder %v841, 384
    %vm844 = vmand %vm842, %vm843
    %845 = vst.msk [vmem:[#allocation3] sm:$0x7] %vm844, %v839
    // Predicated region
    $region22: #{tpu_custom_call.1} parent=1 // pred_check
      _
    $region23: #{tpu_custom_call.1} parent=1 // pred_check_branch
      %847 = sbr.rel (0) target = $region25
    $region24: #{tpu_custom_call.1} parent=1 // pred_region
      %s849 = ssub.s32 48, 48
      %850 = vsyncadd [#allocation4], %s849
      %s852 = sshll.u32 [#allocation3], 4
      %s853 = int_to_ptr.vmem [resolvable:$true] %s852
      %855 = dma.vmem_to_hbm [thread:$0]  %s853, 48, %s5, [#allocation4]
    $region25: #{tpu_custom_call.1} parent=1 // pred_fallthru
      _
    // Predicated region
    $region26: #{tpu_custom_call.1} parent=1 // pred_check
      _
    $region27: #{tpu_custom_call.1} parent=1 // pred_check_branch
      %857 = sbr.rel (0) target = $region29
    $region28: #{tpu_custom_call.1} parent=1 // pred_region
      %858 = dma.done [#allocation4], 48
    $region29: #{tpu_custom_call.1} parent=1 // pred_fallthru
      _
    %859 = vsyncpa [#allocation4], 1

</llo_original>
